<compile_context>
chip_gen: v7x
topology: tpu7x:2x2x1
jax: 0.10.0
libtpu: 0.0.40
codegen_flags: <defaults>
</compile_context>

<pallas_src>
import jax
import jax.numpy as jnp
import numpy as np
from jax import lax
from jax.experimental import pallas as pl
from jax.experimental.pallas import tpu as pltpu

BN_EPS = 1e-5


# ----------------------------------------------------------------------------
# Main (fused, batch-tiled) kernel
# ----------------------------------------------------------------------------
def _cfa_kernel(x_ref, w1_ref, b1_ref, w2_ref, o_ref, ps_ref):
    # x_ref block: (B_TILE, C, HW)  -- channels on sublanes, HW on lanes.
    # ps_ref scratch: (C, B_TILE)   -- pooled columns, later reused for scale.
    w1 = w1_ref[...]                       # (C, C) BN-folded conv1 weight
    b1 = b1_ref[...]                       # (C, 1) BN-folded bias
    w2 = w2_ref[...]                       # (C, C) conv2 weight
    b_tile, c, hw = x_ref.shape
    inv_hw = 1.0 / hw

    # lane-index iota over the (C, B_TILE) pooled matrix (hoisted out of loops)
    col_ids = lax.broadcasted_iota(jnp.int32, (c, b_tile), 1)

    # Pass 1: per-batch conv1 + relu + (avg+max) pooling; stash pooled columns.
    def pool_body(b, carry):
        x = x_ref[b]                                              # (C, HW)
        y = jnp.dot(w1, x, preferred_element_type=jnp.float32) + b1
        y = jnp.maximum(y, 0.0)
        col = (jnp.sum(y, axis=1, keepdims=True) * inv_hw +
               jnp.max(y, axis=1, keepdims=True))                 # (C, 1)
        # place `col` into column b of the pooled matrix (no dynamic lane store)
        ps_ref[...] = jnp.where(col_ids == b, col, ps_ref[...])
        return carry

    lax.fori_loop(0, b_tile, pool_body, 0, unroll=True)

    # One batched conv2 matmul + one sigmoid for the whole batch tile.
    ps_ref[...] = jax.nn.sigmoid(
        jnp.dot(w2, ps_ref[...], preferred_element_type=jnp.float32))

    # Pass 2: out = x * scale (broadcast over HW), per batch.
    def apply_body(b, carry):
        scale_col = jnp.sum(jnp.where(col_ids == b, ps_ref[...], 0.0),
                            axis=1, keepdims=True)                # (C, 1)
        o_ref[b] = (x_ref[b] * scale_col).astype(o_ref.dtype)
        return carry

    lax.fori_loop(0, b_tile, apply_body, 0, unroll=True)


# ----------------------------------------------------------------------------
# Fallback kernels: HW-tiled two-pass path (single slab too large for VMEM)
# ----------------------------------------------------------------------------
def _cfa_pool_kernel(x_ref, w1_ref, b1_ref, sum_ref, max_ref):
    # grid = (N, n_hw_tiles); HW axis is the (arbitrary) reduction axis.
    h = pl.program_id(1)
    y = (jnp.dot(w1_ref[...], x_ref[0], preferred_element_type=jnp.float32)
         + b1_ref[...])
    y = jnp.maximum(y, 0.0)
    s = jnp.sum(y, axis=1, keepdims=True)                         # (C, 1)
    m = jnp.max(y, axis=1, keepdims=True)                         # (C, 1)

    @pl.when(h == 0)
    def _():
        sum_ref[0] = s
        max_ref[0] = m

    @pl.when(h != 0)
    def _():
        sum_ref[0] = sum_ref[0] + s
        max_ref[0] = jnp.maximum(max_ref[0], m)


def _cfa_apply_kernel(x_ref, scale_ref, o_ref):
    o_ref[0] = (x_ref[0] * scale_ref[0]).astype(o_ref.dtype)


# ----------------------------------------------------------------------------
# Tiling / VMEM planning
# ----------------------------------------------------------------------------
def _vmem_budget_bytes():
    """Per-chip VMEM budget with headroom (v7x has only 64 MiB per TC)."""
    try:
        cap = int(pltpu.get_tpu_info().vmem_capacity_bytes)
    except Exception:
        cap = 64 << 20                     # conservative (v7x)
    return max(cap - (16 << 20), 24 << 20)


def _choose_batch_tile(N, per_batch_bytes, b_cap_vmem,
                       target_bytes=8 << 20, max_tile=64):
    """Pick a batch tile: a few MiB per block, >=2 grid steps per TC if N>=4."""
    b = max(1, min(max_tile, b_cap_vmem,
                   target_bytes // max(per_batch_bytes, 1), N))
    if N >= 4:
        b = min(b, N // 4)                 # >=2 grid steps per TensorCore
    b = max(1, min(b, N))
    while N % b:
        b -= 1
    return b


def _choose_hw_tile(HW, C, budget, itemsize):
    """Largest multiple-of-128 divisor of HW whose blocks fit the budget."""
    fixed = 2 * C * C * 4 + (4 << 20)
    cap = int(min((budget - fixed) // (5 * C * max(itemsize, 4)), HW))
    cap = (cap // 128) * 128
    t = cap
    while t >= 128:
        if HW % t == 0:
            return t
        t -= 128
    return None


def _cfa_forward_hw_tiled(x, w1f, b1f, w2m, hw_tile, vmem_limit):
    N, C, HW = x.shape
    n_hw = HW // hw_tile

    sum_out, max_out = pl.pallas_call(
        _cfa_pool_kernel,
        out_shape=(jax.ShapeDtypeStruct((N, C, 1), jnp.float32),
                   jax.ShapeDtypeStruct((N, C, 1), jnp.float32)),
        grid_spec=pltpu.PrefetchScalarGridSpec(
            num_scalar_prefetch=0,
            grid=(N, n_hw),
            in_specs=[
                pl.BlockSpec((1, C, hw_tile), lambda n, h: (n, 0, h)),
                pl.BlockSpec((C, C), lambda n, h: (0, 0)),
                pl.BlockSpec((C, 1), lambda n, h: (0, 0)),
            ],
            out_specs=(pl.BlockSpec((1, C, 1), lambda n, h: (n, 0, 0)),
                       pl.BlockSpec((1, C, 1), lambda n, h: (n, 0, 0))),
        ),
        compiler_params=pltpu.CompilerParams(
            dimension_semantics=("parallel", "arbitrary"),
            vmem_limit_bytes=vmem_limit),
    )(x, w1f, b1f)

    pooled = sum_out[:, :, 0] * (1.0 / HW) + max_out[:, :, 0]      # (N, C)
    scale = jax.nn.sigmoid(pooled @ w2m.T).astype(jnp.float32)[:, :, None]

    out = pl.pallas_call(
        _cfa_apply_kernel,
        out_shape=jax.ShapeDtypeStruct((N, C, HW), x.dtype),
        grid_spec=pltpu.PrefetchScalarGridSpec(
            num_scalar_prefetch=0,
            grid=(N, n_hw),
            in_specs=[
                pl.BlockSpec((1, C, hw_tile), lambda n, h: (n, 0, h)),
                pl.BlockSpec((1, C, 1), lambda n, h: (n, 0, 0)),
            ],
            out_specs=pl.BlockSpec((1, C, hw_tile), lambda n, h: (n, 0, h)),
        ),
        compiler_params=pltpu.CompilerParams(
            dimension_semantics=("parallel", "parallel"),
            vmem_limit_bytes=vmem_limit),
    )(x, scale)
    return out


# ----------------------------------------------------------------------------
# Public wrapper
# ----------------------------------------------------------------------------
def cfa_forward(x_nchw, w1, gamma, beta, running_mean, running_var, w2):
    """x_nchw: (N, C, H, W).  w1, w2: PyTorch conv weights (C, C, 1, 1)."""
    N, C, H, W = x_nchw.shape
    HW = H * W

    # Free layout change: collapse spatial dims (no transpose).
    x = x_nchw.reshape(N, C, HW)

    # conv weights: (C, C, 1, 1) -> (C, C); fold BN (inference) into conv1.
    w1m = w1.reshape(C, C).astype(jnp.float32)
    w2m = w2.reshape(C, C).astype(jnp.float32)
    inv_std = 1.0 / jnp.sqrt(running_var.astype(jnp.float32) + BN_EPS)
    bn_scale = gamma.astype(jnp.float32) * inv_std                 # (C,)
    w1f = w1m * bn_scale[:, None]                                  # row-scaled
    b1f = (beta.astype(jnp.float32)
           - running_mean.astype(jnp.float32) * bn_scale).reshape(C, 1)

    budget = _vmem_budget_bytes()
    itemsize = x.dtype.itemsize
    per_batch = C * HW * itemsize
    y_temp = C * HW * 4                                            # f32 conv1 act
    fixed = 2 * C * C * 4 + (4 << 20)
    b_cap_vmem = max((budget - fixed - y_temp) // (4 * per_batch), 0)

    if b_cap_vmem >= 1:
        b_tile = _choose_batch_tile(N, per_batch, int(b_cap_vmem))
        vmem_needed = 4 * b_tile * per_batch + y_temp + fixed
        vmem_limit = int(min(budget, max(vmem_needed, 32 << 20)))

        out = pl.pallas_call(
            _cfa_kernel,
            out_shape=jax.ShapeDtypeStruct((N, C, HW), x.dtype),
            grid_spec=pltpu.PrefetchScalarGridSpec(
                num_scalar_prefetch=0,
                grid=(N // b_tile,),
                in_specs=[
                    pl.BlockSpec((b_tile, C, HW), lambda n: (n, 0, 0)),  # x
                    pl.BlockSpec((C, C), lambda n: (0, 0)),              # w1 (BN-folded)
                    pl.BlockSpec((C, 1), lambda n: (0, 0)),              # bias (BN-folded)
                    pl.BlockSpec((C, C), lambda n: (0, 0)),              # w2
                ],
                out_specs=pl.BlockSpec((b_tile, C, HW), lambda n: (n, 0, 0)),
                scratch_shapes=[pltpu.VMEM((C, b_tile), jnp.float32)],
            ),
            compiler_params=pltpu.CompilerParams(
                dimension_semantics=("parallel",),
                vmem_limit_bytes=vmem_limit),
        )(x, w1f, b1f, w2m)
    else:
        # Single (C, HW) slab too big for VMEM (e.g. huge images on v7x).
        hw_tile = _choose_hw_tile(HW, C, budget, itemsize)
        if hw_tile is None:
            # TODO(synk): HW not tileable by 128 at this size; use whole slab.
            hw_tile = HW
        vmem_limit = int(min(budget, max(5 * C * hw_tile * 4 + fixed, 32 << 20)))
        out = _cfa_forward_hw_tiled(x, w1f, b1f, w2m, hw_tile, vmem_limit)

    return out.reshape(N, C, H, W)


# ----------------------------------------------------------------------------
# Pure-JAX reference of the PyTorch forward (eval-mode BN), NCHW.
# ----------------------------------------------------------------------------
def _reference(x, w1, gamma, beta, mean, var, w2):
    N, C, H, W = x.shape
    w1m = w1.reshape(C, C)
    w2m = w2.reshape(C, C)
    y = jnp.einsum('oc,nchw->nohw', w1m, x)
    y = (y - mean[None, :, None, None]) / jnp.sqrt(var[None, :, None, None] + BN_EPS)
    y = y * gamma[None, :, None, None] + beta[None, :, None, None]
    y = jnp.maximum(y, 0.0)
    avg = jnp.mean(y, axis=(2, 3))                       # (N, C)
    mx = jnp.max(y, axis=(2, 3))                         # (N, C)
    a = jnp.einsum('oc,nc->no', w2m, avg)
    m = jnp.einsum('oc,nc->no', w2m, mx)
    scale = jax.nn.sigmoid(a + m)[:, :, None, None]
    return x * scale


if __name__ == "__main__":
    key = jax.random.PRNGKey(0)
    k_x, k_w1, k_w2, k_g, k_b, k_m, k_v = jax.random.split(key, 7)

    N, C, H, W = 2, 32, 16, 16
    x = jax.random.normal(k_x, (N, C, H, W), dtype=jnp.float32)

    # Deterministic "synthetic checkpoint" parameters.
    w1 = jax.random.normal(k_w1, (C, C, 1, 1), dtype=jnp.float32) * 0.1
    w2 = jax.random.normal(k_w2, (C, C, 1, 1), dtype=jnp.float32) * 0.1
    gamma = 1.0 + 0.1 * jax.random.normal(k_g, (C,), dtype=jnp.float32)
    beta = 0.1 * jax.random.normal(k_b, (C,), dtype=jnp.float32)
    running_mean = 0.1 * jax.random.normal(k_m, (C,), dtype=jnp.float32)
    running_var = jnp.abs(1.0 + 0.1 * jax.random.normal(k_v, (C,), dtype=jnp.float32))

    out = cfa_forward(x, w1, gamma, beta, running_mean, running_var, w2)
    out = jax.block_until_ready(out)

    ref = jax.block_until_ready(
        _reference(x, w1, gamma, beta, running_mean, running_var, w2))
    np.testing.assert_allclose(np.asarray(out), np.asarray(ref),
                               rtol=1e-5, atol=1e-5)

    print("KERNEL_OK")
</pallas_src>

<mosaic_0001>
module attributes {stable_mosaic.version = 11 : i64} {
  func.func @_cfa_kernel(%arg0: i32, %arg1: memref<2x32x256xf32, #tpu.memory_space<vmem>>, %arg2: memref<32x32xf32, #tpu.memory_space<vmem>>, %arg3: memref<32x1xf32, #tpu.memory_space<vmem>>, %arg4: memref<32x32xf32, #tpu.memory_space<vmem>>, %arg5: memref<2x32x256xf32, #tpu.memory_space<vmem>>, %arg6: memref<32x2xf32, #tpu.memory_space<vmem>>) attributes {dimension_semantics = [#tpu.dimension_semantics<parallel>], iteration_bounds = array<i64: 1>, scalar_prefetch = 0 : i64, scratch_operands = 1 : i64, tpu.core_type = #tpu.core_type<tc>, window_params = [{transform_indices = @transform_0, window_bounds = array<i64: 2, 32, 256>}, {pipeline_mode = #tpu.pipeline_mode<synchronous>, transform_indices = @transform_1, window_bounds = array<i64: 32, 32>}, {pipeline_mode = #tpu.pipeline_mode<synchronous>, transform_indices = @transform_2, window_bounds = array<i64: 32, 1>}, {pipeline_mode = #tpu.pipeline_mode<synchronous>, transform_indices = @transform_3, window_bounds = array<i64: 32, 32>}, {transform_indices = @transform_4, window_bounds = array<i64: 2, 32, 256>}]} {
    %c0 = arith.constant 0 : index
    %c0_0 = arith.constant 0 : index
    %0 = vector.load %arg2[%c0, %c0_0] : memref<32x32xf32, #tpu.memory_space<vmem>>, vector<32x32xf32>
    %c0_1 = arith.constant 0 : index
    %c0_2 = arith.constant 0 : index
    %1 = vector.load %arg3[%c0_1, %c0_2] : memref<32x1xf32, #tpu.memory_space<vmem>>, vector<32x1xf32>
    %c0_3 = arith.constant 0 : index
    %c0_4 = arith.constant 0 : index
    %2 = vector.load %arg4[%c0_3, %c0_4] : memref<32x32xf32, #tpu.memory_space<vmem>>, vector<32x32xf32>
    %3 = tpu.iota {dimensions = array<i32: 1>} : vector<32x2xi32>
    %c0_i32 = arith.constant 0 : i32
    %4 = arith.index_cast %c0_i32 : i32 to index
    %c0_5 = arith.constant 0 : index
    %c0_6 = arith.constant 0 : index
    %5 = vector.load %arg1[%4, %c0_5, %c0_6] : memref<2x32x256xf32, #tpu.memory_space<vmem>>, vector<1x32x256xf32>
    %6 = vector.shape_cast %5 : vector<1x32x256xf32> to vector<32x256xf32>
    %cst = arith.constant dense<0.000000e+00> : vector<32x256xf32>
    %7 = tpu.matmul %0, %6, %cst {dimension_numbers = #tpu.dot_dimension_numbers<[1], [0], [0], [1], [0, 0, 1, 1], [], []>} : vector<32x32xf32>, vector<32x256xf32>, vector<32x256xf32> -> vector<32x256xf32>
    %8 = vector.broadcast %1 : vector<32x1xf32> to vector<32x256xf32>
    %9 = arith.addf %7, %8 : vector<32x256xf32>
    %cst_7 = arith.constant 0.000000e+00 : f32
    %10 = vector.broadcast %cst_7 : f32 to vector<32x256xf32>
    %11 = arith.maximumf %9, %10 : vector<32x256xf32>
    %cst_8 = arith.constant dense<0.000000e+00> : vector<32xf32>
    %12 = vector.multi_reduction <add>, %11, %cst_8 [1] : vector<32x256xf32> to vector<32xf32>
    %13 = vector.shape_cast %12 : vector<32xf32> to vector<32x1xf32>
    %cst_9 = arith.constant 3.906250e-03 : f32
    %14 = vector.broadcast %cst_9 : f32 to vector<32x1xf32>
    %15 = arith.mulf %13, %14 : vector<32x1xf32>
    %cst_10 = arith.constant dense<0xFF800000> : vector<32xf32>
    %16 = vector.multi_reduction <maximumf>, %11, %cst_10 [1] : vector<32x256xf32> to vector<32xf32>
    %17 = vector.shape_cast %16 : vector<32xf32> to vector<32x1xf32>
    %18 = arith.addf %15, %17 : vector<32x1xf32>
    %19 = vector.broadcast %c0_i32 : i32 to vector<32x2xi32>
    %20 = arith.cmpi eq, %3, %19 : vector<32x2xi32>
    %c0_11 = arith.constant 0 : index
    %c0_12 = arith.constant 0 : index
    %21 = vector.load %arg6[%c0_11, %c0_12] : memref<32x2xf32, #tpu.memory_space<vmem>>, vector<32x2xf32>
    %22 = vector.shape_cast %18 : vector<32x1xf32> to vector<32x1xf32>
    %23 = vector.broadcast %22 : vector<32x1xf32> to vector<32x2xf32>
    %24 = arith.select %20, %23, %21 : vector<32x2xi1>, vector<32x2xf32>
    %c0_13 = arith.constant 0 : index
    %c0_14 = arith.constant 0 : index
    %25 = vector.load %arg6[%c0_13, %c0_14] : memref<32x2xf32, #tpu.memory_space<vmem>>, vector<32x2xf32>
    tpu.vector_store %arg6[%c0_13, %c0_14], %24 {strides = array<i32>} : memref<32x2xf32, #tpu.memory_space<vmem>>, vector<32x2xf32>,
    %c1_i32 = arith.constant 1 : i32
    %26 = arith.index_cast %c1_i32 : i32 to index
    %c0_15 = arith.constant 0 : index
    %c0_16 = arith.constant 0 : index
    %27 = vector.load %arg1[%26, %c0_15, %c0_16] : memref<2x32x256xf32, #tpu.memory_space<vmem>>, vector<1x32x256xf32>
    %28 = vector.shape_cast %27 : vector<1x32x256xf32> to vector<32x256xf32>
    %cst_17 = arith.constant dense<0.000000e+00> : vector<32x256xf32>
    %29 = tpu.matmul %0, %28, %cst_17 {dimension_numbers = #tpu.dot_dimension_numbers<[1], [0], [0], [1], [0, 0, 1, 1], [], []>} : vector<32x32xf32>, vector<32x256xf32>, vector<32x256xf32> -> vector<32x256xf32>
    %30 = vector.broadcast %1 : vector<32x1xf32> to vector<32x256xf32>
    %31 = arith.addf %29, %30 : vector<32x256xf32>
    %cst_18 = arith.constant 0.000000e+00 : f32
    %32 = vector.broadcast %cst_18 : f32 to vector<32x256xf32>
    %33 = arith.maximumf %31, %32 : vector<32x256xf32>
    %cst_19 = arith.constant dense<0.000000e+00> : vector<32xf32>
    %34 = vector.multi_reduction <add>, %33, %cst_19 [1] : vector<32x256xf32> to vector<32xf32>
    %35 = vector.shape_cast %34 : vector<32xf32> to vector<32x1xf32>
    %cst_20 = arith.constant 3.906250e-03 : f32
    %36 = vector.broadcast %cst_20 : f32 to vector<32x1xf32>
    %37 = arith.mulf %35, %36 : vector<32x1xf32>
    %cst_21 = arith.constant dense<0xFF800000> : vector<32xf32>
    %38 = vector.multi_reduction <maximumf>, %33, %cst_21 [1] : vector<32x256xf32> to vector<32xf32>
    %39 = vector.shape_cast %38 : vector<32xf32> to vector<32x1xf32>
    %40 = arith.addf %37, %39 : vector<32x1xf32>
    %41 = vector.broadcast %c1_i32 : i32 to vector<32x2xi32>
    %42 = arith.cmpi eq, %3, %41 : vector<32x2xi32>
    %c0_22 = arith.constant 0 : index
    %c0_23 = arith.constant 0 : index
    %43 = vector.load %arg6[%c0_22, %c0_23] : memref<32x2xf32, #tpu.memory_space<vmem>>, vector<32x2xf32>
    %44 = vector.shape_cast %40 : vector<32x1xf32> to vector<32x1xf32>
    %45 = vector.broadcast %44 : vector<32x1xf32> to vector<32x2xf32>
    %46 = arith.select %42, %45, %43 : vector<32x2xi1>, vector<32x2xf32>
    %c0_24 = arith.constant 0 : index
    %c0_25 = arith.constant 0 : index
    %47 = vector.load %arg6[%c0_24, %c0_25] : memref<32x2xf32, #tpu.memory_space<vmem>>, vector<32x2xf32>
    tpu.vector_store %arg6[%c0_24, %c0_25], %46 {strides = array<i32>} : memref<32x2xf32, #tpu.memory_space<vmem>>, vector<32x2xf32>,
    %c2_i32 = arith.constant 2 : i32
    %c0_26 = arith.constant 0 : index
    %c0_27 = arith.constant 0 : index
    %48 = vector.load %arg6[%c0_26, %c0_27] : memref<32x2xf32, #tpu.memory_space<vmem>>, vector<32x2xf32>
    %cst_28 = arith.constant dense<0.000000e+00> : vector<32x2xf32>
    %49 = tpu.matmul %2, %48, %cst_28 {dimension_numbers = #tpu.dot_dimension_numbers<[1], [0], [0], [1], [0, 0, 1, 1], [], []>} : vector<32x32xf32>, vector<32x2xf32>, vector<32x2xf32> -> vector<32x2xf32>
    %50 = arith.negf %49 : vector<32x2xf32>
    %51 = math.exp %50 : vector<32x2xf32>
    %cst_29 = arith.constant 1.000000e+00 : f32
    %52 = vector.broadcast %cst_29 : f32 to vector<32x2xf32>
    %53 = arith.addf %52, %51 : vector<32x2xf32>
    %54 = arith.divf %52, %53 : vector<32x2xf32>
    %c0_30 = arith.constant 0 : index
    %c0_31 = arith.constant 0 : index
    %55 = vector.load %arg6[%c0_30, %c0_31] : memref<32x2xf32, #tpu.memory_space<vmem>>, vector<32x2xf32>
    tpu.vector_store %arg6[%c0_30, %c0_31], %54 {strides = array<i32>} : memref<32x2xf32, #tpu.memory_space<vmem>>, vector<32x2xf32>,
    %c0_i32_32 = arith.constant 0 : i32
    %56 = vector.broadcast %c0_i32_32 : i32 to vector<32x2xi32>
    %57 = arith.cmpi eq, %3, %56 : vector<32x2xi32>
    %c0_33 = arith.constant 0 : index
    %c0_34 = arith.constant 0 : index
    %58 = vector.load %arg6[%c0_33, %c0_34] : memref<32x2xf32, #tpu.memory_space<vmem>>, vector<32x2xf32>
    %cst_35 = arith.constant 0.000000e+00 : f32
    %59 = vector.broadcast %cst_35 : f32 to vector<32x2xf32>
    %60 = arith.select %57, %58, %59 : vector<32x2xi1>, vector<32x2xf32>
    %cst_36 = arith.constant dense<0.000000e+00> : vector<32xf32>
    %61 = vector.multi_reduction <add>, %60, %cst_36 [1] : vector<32x2xf32> to vector<32xf32>
    %62 = vector.shape_cast %61 : vector<32xf32> to vector<32x1xf32>
    %63 = arith.index_cast %c0_i32_32 : i32 to index
    %c0_37 = arith.constant 0 : index
    %c0_38 = arith.constant 0 : index
    %64 = vector.load %arg1[%63, %c0_37, %c0_38] : memref<2x32x256xf32, #tpu.memory_space<vmem>>, vector<1x32x256xf32>
    %65 = vector.shape_cast %64 : vector<1x32x256xf32> to vector<32x256xf32>
    %66 = vector.broadcast %62 : vector<32x1xf32> to vector<32x256xf32>
    %67 = arith.mulf %65, %66 : vector<32x256xf32>
    %68 = arith.index_cast %c0_i32_32 : i32 to index
    %c0_39 = arith.constant 0 : index
    %c0_40 = arith.constant 0 : index
    %69 = vector.load %arg5[%68, %c0_39, %c0_40] : memref<2x32x256xf32, #tpu.memory_space<vmem>>, vector<1x32x256xf32>
    %70 = vector.shape_cast %69 : vector<1x32x256xf32> to vector<32x256xf32>
    %71 = vector.shape_cast %67 : vector<32x256xf32> to vector<1x32x256xf32>
    tpu.vector_store %arg5[%68, %c0_39, %c0_40], %71 {strides = array<i32>} : memref<2x32x256xf32, #tpu.memory_space<vmem>>, vector<1x32x256xf32>,
    %c1_i32_41 = arith.constant 1 : i32
    %72 = vector.broadcast %c1_i32_41 : i32 to vector<32x2xi32>
    %73 = arith.cmpi eq, %3, %72 : vector<32x2xi32>
    %c0_42 = arith.constant 0 : index
    %c0_43 = arith.constant 0 : index
    %74 = vector.load %arg6[%c0_42, %c0_43] : memref<32x2xf32, #tpu.memory_space<vmem>>, vector<32x2xf32>
    %cst_44 = arith.constant 0.000000e+00 : f32
    %75 = vector.broadcast %cst_44 : f32 to vector<32x2xf32>
    %76 = arith.select %73, %74, %75 : vector<32x2xi1>, vector<32x2xf32>
    %cst_45 = arith.constant dense<0.000000e+00> : vector<32xf32>
    %77 = vector.multi_reduction <add>, %76, %cst_45 [1] : vector<32x2xf32> to vector<32xf32>
    %78 = vector.shape_cast %77 : vector<32xf32> to vector<32x1xf32>
    %79 = arith.index_cast %c1_i32_41 : i32 to index
    %c0_46 = arith.constant 0 : index
    %c0_47 = arith.constant 0 : index
    %80 = vector.load %arg1[%79, %c0_46, %c0_47] : memref<2x32x256xf32, #tpu.memory_space<vmem>>, vector<1x32x256xf32>
    %81 = vector.shape_cast %80 : vector<1x32x256xf32> to vector<32x256xf32>
    %82 = vector.broadcast %78 : vector<32x1xf32> to vector<32x256xf32>
    %83 = arith.mulf %81, %82 : vector<32x256xf32>
    %84 = arith.index_cast %c1_i32_41 : i32 to index
    %c0_48 = arith.constant 0 : index
    %c0_49 = arith.constant 0 : index
    %85 = vector.load %arg5[%84, %c0_48, %c0_49] : memref<2x32x256xf32, #tpu.memory_space<vmem>>, vector<1x32x256xf32>
    %86 = vector.shape_cast %85 : vector<1x32x256xf32> to vector<32x256xf32>
    %87 = vector.shape_cast %83 : vector<32x256xf32> to vector<1x32x256xf32>
    tpu.vector_store %arg5[%84, %c0_48, %c0_49], %87 {strides = array<i32>} : memref<2x32x256xf32, #tpu.memory_space<vmem>>, vector<1x32x256xf32>,
    %c2_i32_50 = arith.constant 2 : i32
    return
  }
  func.func @transform_0(%arg0: i32) -> (i32, i32, i32) {
    %c0_i32 = arith.constant 0 : i32
    %c0_i32_0 = arith.constant 0 : i32
    %c0_i32_1 = arith.constant 0 : i32
    return %arg0, %c0_i32, %c0_i32_0 : i32, i32, i32
  }
  func.func @transform_1(%arg0: i32) -> (i32, i32) {
    %c0_i32 = arith.constant 0 : i32
    %c0_i32_0 = arith.constant 0 : i32
    %c0_i32_1 = arith.constant 0 : i32
    return %c0_i32, %c0_i32_0 : i32, i32
  }
  func.func @transform_2(%arg0: i32) -> (i32, i32) {
    %c0_i32 = arith.constant 0 : i32
    %c0_i32_0 = arith.constant 0 : i32
    %c0_i32_1 = arith.constant 0 : i32
    return %c0_i32, %c0_i32_0 : i32, i32
  }
  func.func @transform_3(%arg0: i32) -> (i32, i32) {
    %c0_i32 = arith.constant 0 : i32
    %c0_i32_0 = arith.constant 0 : i32
    %c0_i32_1 = arith.constant 0 : i32
    return %c0_i32, %c0_i32_0 : i32, i32
  }
  func.func @transform_4(%arg0: i32) -> (i32, i32, i32) {
    %c0_i32 = arith.constant 0 : i32
    %c0_i32_0 = arith.constant 0 : i32
    %c0_i32_1 = arith.constant 0 : i32
    return %arg0, %c0_i32, %c0_i32_0 : i32, i32, i32
  }
}

</mosaic_0001>

<llo_original>
// kernel: tpu_custom_call.1
$region0: #{tpu_custom_call.1}
  #allocation0 [shape = 'u32[]', space=smem, size = 0x4, offset = 0x4, fixed_abs, tag = 'smem constant byte address 0x4 - core index']
  #allocation1 [shape = 'u32[144,128]{1,0:T(1,128)}', space=vmem, size = 0x12000, scoped, tag = 'internal scratch']
  #allocation2 [shape = 'f32[32,2]{1,0:T(8,128)}', space=vmem, size = 0x4000, scoped, tag = 'scratch operand']
  %s0 = inlined_call_operand.hbm [shape: f32[2,32,256], index: 0, kind: input, shape index: {}]
  %s1 = inlined_call_operand.vmem [shape: f32[32,32], index: 1, kind: input, shape index: {}]
  %s2 = inlined_call_operand.vmem [shape: f32[32,1], index: 2, kind: input, shape index: {}]
  %s3 = inlined_call_operand.hbm [shape: f32[32,32], index: 3, kind: input, shape index: {}]
  %s4 = inlined_call_operand.hbm [shape: f32[2,32,256], index: 4, kind: output, shape index: {}]
  %s5 = sld [smem:[#allocation0]]
  $region34: #{tpu_custom_call.1} parent=0
    _
  %s7 = ssub.s32 1, %s5
  %s8 = scalar_select 0, %s7, %s5
  $region1: #{tpu_custom_call.1} parent=0
    #allocation3 [shape = 'u8[65536]{0}', space=vmem, size = 0x10000, scoped, tag = 'input window, operand 0, single buffered']
    #allocation4 [shape = 's32[1]{0}', space=sflag, size = 0x4, scoped, tag = 'scoped memory for tpu_custom_call.1']
    #allocation5 [shape = 's32[1]{0}', space=sflag, size = 0x4, scoped, tag = 'scoped memory for tpu_custom_call.1']
    #allocation6 [shape = 'u8[16384]{0}', space=vmem, size = 0x4000, scoped, tag = 'input window, operand 3, single buffered']
    #allocation7 [shape = 's32[1]{0}', space=sflag, size = 0x4, scoped, tag = 'scoped memory for tpu_custom_call.1']
    #allocation8 [shape = 'u8[65536]{0}', space=vmem, size = 0x10000, scoped, tag = 'output window, operand 0, single buffered']
    %9 = vsyncpa [#allocation4], 0
    %10 = vsyncpa [#allocation7], 0
    %11 = vsyncpa [#allocation5], 0
    // Predicated region
    $region2: #{tpu_custom_call.1} parent=1 // pred_check
      _
    $region3: #{tpu_custom_call.1} parent=1 // pred_check_branch
      %13 = sbr.rel (0) target = $region5
    $region4: #{tpu_custom_call.1} parent=1 // pred_region
      %s15 = ssub.s32 2048, 2048
      %16 = vsyncadd [#allocation4], %s15
      %s17 = sshll.u32 [#allocation3], 4
      %s18 = int_to_ptr.vmem [resolvable:$true] %s17
      %23 = dma.hbm_to_vmem [thread:$0]  %s0, 2048, %s18, [#allocation4], 256, 256, 16
    $region5: #{tpu_custom_call.1} parent=1 // pred_fallthru
      _
    // Predicated region
    $region6: #{tpu_custom_call.1} parent=1 // pred_check
      _
    $region7: #{tpu_custom_call.1} parent=1 // pred_check_branch
      %25 = sbr.rel (0) target = $region9
    $region8: #{tpu_custom_call.1} parent=1 // pred_region
      _
    $region9: #{tpu_custom_call.1} parent=1 // pred_fallthru
      _
    // Predicated region
    $region10: #{tpu_custom_call.1} parent=1 // pred_check
      _
    $region11: #{tpu_custom_call.1} parent=1 // pred_check_branch
      %27 = sbr.rel (0) target = $region13
    $region12: #{tpu_custom_call.1} parent=1 // pred_region
      _
    $region13: #{tpu_custom_call.1} parent=1 // pred_fallthru
      _
    // Predicated region
    $region14: #{tpu_custom_call.1} parent=1 // pred_check
      _
    $region15: #{tpu_custom_call.1} parent=1 // pred_check_branch
      %29 = sbr.rel (0) target = $region17
    $region16: #{tpu_custom_call.1} parent=1 // pred_region
      %s31 = ssub.s32 512, 512
      %32 = vsyncadd [#allocation7], %s31
      %s33 = sshll.u32 [#allocation6], 4
      %s34 = int_to_ptr.vmem [resolvable:$true] %s33
      %39 = dma.hbm_to_vmem [thread:$0]  %s3, 512, %s34, [#allocation7], 128, 128, 8
    $region17: #{tpu_custom_call.1} parent=1 // pred_fallthru
      _
    // Predicated region
    $region18: #{tpu_custom_call.1} parent=1 // pred_check
      _
    $region19: #{tpu_custom_call.1} parent=1 // pred_check_branch
      %41 = sbr.rel (0) target = $region21
    $region20: #{tpu_custom_call.1} parent=1 // pred_region
      %42 = dma.done [#allocation4], 2048
    $region21: #{tpu_custom_call.1} parent=1 // pred_fallthru
      _
    // Predicated region
    $region22: #{tpu_custom_call.1} parent=1 // pred_check
      _
    $region23: #{tpu_custom_call.1} parent=1 // pred_check_branch
      %44 = sbr.rel (0) target = $region25
    $region24: #{tpu_custom_call.1} parent=1 // pred_region
      %45 = dma.done [#allocation7], 512
    $region25: #{tpu_custom_call.1} parent=1 // pred_fallthru
      _
    %v46 = vld [vmem:[%s1] sm:$0xff]
    %v47 = vld [vmem:[%s1 + $0x8] sm:$0xff]
    %v48 = vld [vmem:[%s1 + $0x10] sm:$0xff]
    %v49 = vld [vmem:[%s1 + $0x18] sm:$0xff]
    %v50 = vld [vmem:[%s2] sm:$0xff]
    %v51 = vld [vmem:[%s2 + $0x8] sm:$0xff]
    %v52 = vld [vmem:[%s2 + $0x10] sm:$0xff]
    %v53 = vld [vmem:[%s2 + $0x18] sm:$0xff]
    %v54 = vld [vmem:[#allocation6] sm:$0xff]
    %v55 = vld [vmem:[#allocation6 + $0x8] sm:$0xff]
    %v56 = vld [vmem:[#allocation6 + $0x10] sm:$0xff]
    %v57 = vld [vmem:[#allocation6 + $0x18] sm:$0xff]
    %v58 = vlaneseq
    %v59 = vand.u32 %v58, 127
    %v60 = vld [vmem:[#allocation3] sm:$0xff]
    %v61 = vld [vmem:[#allocation3 + $0x8] sm:$0xff]
    %v62 = vld [vmem:[#allocation3 + $0x10] sm:$0xff]
    %v63 = vld [vmem:[#allocation3 + $0x18] sm:$0xff]
    %v64 = vld [vmem:[#allocation3 + $0x20] sm:$0xff]
    %v65 = vld [vmem:[#allocation3 + $0x28] sm:$0xff]
    %v66 = vld [vmem:[#allocation3 + $0x30] sm:$0xff]
    %v67 = vld [vmem:[#allocation3 + $0x38] sm:$0xff]
    %69 = vset.pattern.permute.xlu0 0
    %70 = vperm.xlu0 %69, %v50
    %v71 = vpop.permute.xlu0 %70
    %74 = vset.pattern.permute.xlu0 0
    %75 = vperm.xlu0 %74, %v51
    %v76 = vpop.permute.xlu0 %75
    %79 = vset.pattern.permute.xlu0 0
    %80 = vperm.xlu0 %79, %v52
    %v81 = vpop.permute.xlu0 %80
    %84 = vset.pattern.permute.xlu0 0
    %85 = vperm.xlu0 %84, %v53
    %v86 = vpop.permute.xlu0 %85
    %vm88 = vcmask 261120
    %v90 = vsel %vm88, %v46, 0
    %v93 = vsel %vm88, %v47, 0
    %v96 = vsel %vm88, %v48, 0
    %v99 = vsel %vm88, %v49, 0
    %101 = vmatprep.subr.mxu0 %v61
    %102 = vmatpush1.msra.mxu0 %v60
    %103 = vmatprep.subr.mxu0 %v63
    %104 = vmatpush1.msra.mxu0 %v62
    %105 = vmatprep.subr.mxu0 %v65
    %106 = vmatpush1.msra.mxu0 %v64
    %107 = vmatprep.subr.mxu0 %v67
    %108 = vmatpush1.msra.mxu0 %v66
    %109 = vmatprep.subr.mxu0 0.0
    %110 = vmatpush1.msra.mxu0 0.0
    %111 = vmatprep.subr.mxu0 0.0
    %112 = vmatpush1.msra.mxu0 0.0
    %113 = vmatprep.subr.mxu0 0.0
    %114 = vmatpush1.msra.mxu0 0.0
    %115 = vmatprep.subr.mxu0 0.0
    %116 = vmatpush1.msra.mxu0 0.0
    %117 = vmatprep.subr.mxu0 0.0
    %118 = vmatpush1.msra.mxu0 0.0
    %119 = vmatprep.subr.mxu0 0.0
    %120 = vmatpush1.msra.mxu0 0.0
    %121 = vmatprep.subr.mxu0 0.0
    %122 = vmatpush1.msra.mxu0 0.0
    %123 = vmatprep.subr.mxu0 0.0
    %124 = vmatpush1.msra.mxu0 0.0
    %125 = vmatprep.subr.mxu0 0.0
    %126 = vmatpush1.msra.mxu0 0.0
    %127 = vmatprep.subr.mxu0 0.0
    %128 = vmatpush1.msra.mxu0 0.0
    %129 = vmatprep.subr.mxu0 0.0
    %130 = vmatpush1.msra.mxu0 0.0
    %131 = vmatprep.subr.mxu0 0.0
    %132 = vmatpush1.msra.mxu0 0.0
    %133 = vmatprep.subr.mxu0 0.0
    %134 = vmatpush1.msra.mxu0 0.0
    %135 = vmatprep.subr.mxu0 0.0
    %136 = vmatpush1.msra.mxu0 0.0
    %137 = vmatprep.subr.mxu0 0.0
    %138 = vmatpush1.msra.mxu0 0.0
    %139 = vmatprep.subr.mxu0 0.0
    %140 = vmatpush1.msra.mxu0 0.0
    %141 = vmatprep.subr.mxu0 0.0
    %142 = vmatpush1.msra.mxu0 0.0
    %143 = vmatprep.subr.mxu0 0.0
    %144 = vmatpush1.msra.mxu0 0.0
    %145 = vmatprep.subr.mxu0 0.0
    %146 = vmatpush1.msra.mxu0 0.0
    %147 = vmatprep.subr.mxu0 0.0
    %148 = vmatpush1.msra.mxu0 0.0
    %149 = vmatprep.subr.mxu0 0.0
    %150 = vmatpush1.msra.mxu0 0.0
    %151 = vmatprep.subr.mxu0 0.0
    %152 = vmatpush1.msra.mxu0 0.0
    %153 = vmatprep.subr.mxu0 0.0
    %154 = vmatpush1.msra.mxu0 0.0
    %155 = vmatprep.subr.mxu0 0.0
    %156 = vmatpush1.msra.mxu0 0.0
    %157 = vmatprep.subr.mxu0 0.0
    %158 = vmatpush1.msra.mxu0 0.0
    %159 = vmatprep.subr.mxu0 0.0
    %160 = vmatpush1.msra.mxu0 0.0
    %161 = vmatprep.subr.mxu0 0.0
    %162 = vmatpush1.msra.mxu0 0.0
    %163 = vmatprep.subr.mxu0 0.0
    %164 = vmatpush1.msra.mxu0 0.0
    %165 = vmatprep.mubr.f32.mxu0 0.0
    %166 = vmatmul.mubr.f32.gmra.mrb[0].mxu0 %v90
    %v167 = vpop.f32.mrb[0].mxu0
    %v168 = vadd.f32 %v71, %v167
    %v169 = vpop.f32.mrb[0].mxu0
    %v170 = vadd.f32 %v71, %v169
    %171 = vmatprep.mubr.f32.mxu0 0.0
    %172 = vmatmul.mubr.f32.gmra.mrb[0].mxu0 %v93
    %v173 = vpop.f32.mrb[0].mxu0
    %v174 = vadd.f32 %v76, %v173
    %v175 = vpop.f32.mrb[0].mxu0
    %v176 = vadd.f32 %v76, %v175
    %177 = vmatprep.mubr.f32.mxu0 0.0
    %178 = vmatmul.mubr.f32.gmra.mrb[0].mxu0 %v96
    %v179 = vpop.f32.mrb[0].mxu0
    %v180 = vadd.f32 %v81, %v179
    %v181 = vpop.f32.mrb[0].mxu0
    %v182 = vadd.f32 %v81, %v181
    %183 = vmatprep.mubr.f32.mxu0 0.0
    %184 = vmatmul.mubr.f32.gmra.mrb[0].mxu0 %v99
    %v185 = vpop.f32.mrb[0].mxu0
    %v186 = vadd.f32 %v86, %v185
    %v187 = vpop.f32.mrb[0].mxu0
    %v188 = vadd.f32 %v86, %v187
    %189 = vdwg.mxu0
    %v190 = vmax.f32 %v168, 0.0
    %v191 = vmax.f32 %v170, 0.0
    %v192 = vmax.f32 %v174, 0.0
    %v193 = vmax.f32 %v176, 0.0
    %v194 = vmax.f32 %v180, 0.0
    %v195 = vmax.f32 %v182, 0.0
    %v196 = vmax.f32 %v186, 0.0
    %v197 = vmax.f32 %v188, 0.0
    %v198 = vadd.f32 %v190, %v191
    %199 = vadd.xlane.f32.xlu0 %v198
    %v200 = vpop.xlane.xlu0 %199
    %v201 = vadd.f32 %v192, %v193
    %202 = vadd.xlane.f32.xlu0 %v201
    %v203 = vpop.xlane.xlu0 %202
    %v204 = vadd.f32 %v194, %v195
    %205 = vadd.xlane.f32.xlu0 %v204
    %v206 = vpop.xlane.xlu0 %205
    %v207 = vadd.f32 %v196, %v197
    %208 = vadd.xlane.f32.xlu0 %v207
    %v209 = vpop.xlane.xlu0 %208
    %v210 = vmul.f32 %v200, 0.00390625
    %v211 = vmul.f32 %v203, 0.00390625
    %v212 = vmul.f32 %v206, 0.00390625
    %v213 = vmul.f32 %v209, 0.00390625
    %v214 = vmax.f32 %v190, %v191
    %215 = vmax.xlane.f32.xlu0 %v214
    %v216 = vpop.xlane.xlu0 %215
    %v217 = vmax.f32 %v192, %v193
    %218 = vmax.xlane.f32.xlu0 %v217
    %v219 = vpop.xlane.xlu0 %218
    %v220 = vmax.f32 %v194, %v195
    %221 = vmax.xlane.f32.xlu0 %v220
    %v222 = vpop.xlane.xlu0 %221
    %v223 = vmax.f32 %v196, %v197
    %224 = vmax.xlane.f32.xlu0 %v223
    %v225 = vpop.xlane.xlu0 %224
    %v226 = vadd.f32 %v210, %v216
    %v227 = vadd.f32 %v211, %v219
    %v228 = vadd.f32 %v212, %v222
    %v229 = vadd.f32 %v213, %v225
    %vm230 = vcmp.eq.s32.totalorder %v59, 0
    %v231 = vld [vmem:[#allocation2] sm:$0xff]
    %v232 = vld [vmem:[#allocation2 + $0x8] sm:$0xff]
    %v233 = vld [vmem:[#allocation2 + $0x10] sm:$0xff]
    %v234 = vld [vmem:[#allocation2 + $0x18] sm:$0xff]
    %v235 = vsel %vm230, %v226, %v231
    %v236 = vsel %vm230, %v227, %v232
    %v237 = vsel %vm230, %v228, %v233
    %v238 = vsel %vm230, %v229, %v234
    %vm239 = vcmask 15360
    %240 = vst.msk [vmem:[#allocation2] sm:$0xff] %vm239, %v235
    %241 = vst.msk [vmem:[#allocation2 + $0x8] sm:$0xff] %vm239, %v236
    %242 = vst.msk [vmem:[#allocation2 + $0x10] sm:$0xff] %vm239, %v237
    %243 = vst.msk [vmem:[#allocation2 + $0x18] sm:$0xff] %vm239, %v238
    %s244 = scalar_lea.vmem [#allocation3], 64
    %v245 = vld [vmem:[%s244] sm:$0xff]
    %v246 = vld [vmem:[%s244 + $0x8] sm:$0xff]
    %v247 = vld [vmem:[%s244 + $0x10] sm:$0xff]
    %v248 = vld [vmem:[%s244 + $0x18] sm:$0xff]
    %v249 = vld [vmem:[%s244 + $0x20] sm:$0xff]
    %v250 = vld [vmem:[%s244 + $0x28] sm:$0xff]
    %v251 = vld [vmem:[%s244 + $0x30] sm:$0xff]
    %v252 = vld [vmem:[%s244 + $0x38] sm:$0xff]
    %253 = vmatprep.subr.mxu0 %v246
    %254 = vmatpush1.msra.mxu0 %v245
    %255 = vmatprep.subr.mxu0 %v248
    %256 = vmatpush1.msra.mxu0 %v247
    %257 = vmatprep.subr.mxu0 %v250
    %258 = vmatpush1.msra.mxu0 %v249
    %259 = vmatprep.subr.mxu0 %v252
    %260 = vmatpush1.msra.mxu0 %v251
    %261 = vmatprep.subr.mxu0 0.0
    %262 = vmatpush1.msra.mxu0 0.0
    %263 = vmatprep.subr.mxu0 0.0
    %264 = vmatpush1.msra.mxu0 0.0
    %265 = vmatprep.subr.mxu0 0.0
    %266 = vmatpush1.msra.mxu0 0.0
    %267 = vmatprep.subr.mxu0 0.0
    %268 = vmatpush1.msra.mxu0 0.0
    %269 = vmatprep.subr.mxu0 0.0
    %270 = vmatpush1.msra.mxu0 0.0
    %271 = vmatprep.subr.mxu0 0.0
    %272 = vmatpush1.msra.mxu0 0.0
    %273 = vmatprep.subr.mxu0 0.0
    %274 = vmatpush1.msra.mxu0 0.0
    %275 = vmatprep.subr.mxu0 0.0
    %276 = vmatpush1.msra.mxu0 0.0
    %277 = vmatprep.subr.mxu0 0.0
    %278 = vmatpush1.msra.mxu0 0.0
    %279 = vmatprep.subr.mxu0 0.0
    %280 = vmatpush1.msra.mxu0 0.0
    %281 = vmatprep.subr.mxu0 0.0
    %282 = vmatpush1.msra.mxu0 0.0
    %283 = vmatprep.subr.mxu0 0.0
    %284 = vmatpush1.msra.mxu0 0.0
    %285 = vmatprep.subr.mxu0 0.0
    %286 = vmatpush1.msra.mxu0 0.0
    %287 = vmatprep.subr.mxu0 0.0
    %288 = vmatpush1.msra.mxu0 0.0
    %289 = vmatprep.subr.mxu0 0.0
    %290 = vmatpush1.msra.mxu0 0.0
    %291 = vmatprep.subr.mxu0 0.0
    %292 = vmatpush1.msra.mxu0 0.0
    %293 = vmatprep.subr.mxu0 0.0
    %294 = vmatpush1.msra.mxu0 0.0
    %295 = vmatprep.subr.mxu0 0.0
    %296 = vmatpush1.msra.mxu0 0.0
    %297 = vmatprep.subr.mxu0 0.0
    %298 = vmatpush1.msra.mxu0 0.0
    %299 = vmatprep.subr.mxu0 0.0
    %300 = vmatpush1.msra.mxu0 0.0
    %301 = vmatprep.subr.mxu0 0.0
    %302 = vmatpush1.msra.mxu0 0.0
    %303 = vmatprep.subr.mxu0 0.0
    %304 = vmatpush1.msra.mxu0 0.0
    %305 = vmatprep.subr.mxu0 0.0
    %306 = vmatpush1.msra.mxu0 0.0
    %307 = vmatprep.subr.mxu0 0.0
    %308 = vmatpush1.msra.mxu0 0.0
    %309 = vmatprep.subr.mxu0 0.0
    %310 = vmatpush1.msra.mxu0 0.0
    %311 = vmatprep.subr.mxu0 0.0
    %312 = vmatpush1.msra.mxu0 0.0
    %313 = vmatprep.subr.mxu0 0.0
    %314 = vmatpush1.msra.mxu0 0.0
    %315 = vmatprep.subr.mxu0 0.0
    %316 = vmatpush1.msra.mxu0 0.0
    %317 = vmatprep.mubr.f32.mxu0 0.0
    %318 = vmatmul.mubr.f32.gmra.mrb[0].mxu0 %v90
    %v319 = vpop.f32.mrb[0].mxu0
    %v320 = vadd.f32 %v71, %v319
    %v321 = vpop.f32.mrb[0].mxu0
    %v322 = vadd.f32 %v71, %v321
    %323 = vmatprep.mubr.f32.mxu0 0.0
    %324 = vmatmul.mubr.f32.gmra.mrb[0].mxu0 %v93
    %v325 = vpop.f32.mrb[0].mxu0
    %v326 = vadd.f32 %v76, %v325
    %v327 = vpop.f32.mrb[0].mxu0
    %v328 = vadd.f32 %v76, %v327
    %329 = vmatprep.mubr.f32.mxu0 0.0
    %330 = vmatmul.mubr.f32.gmra.mrb[0].mxu0 %v96
    %v331 = vpop.f32.mrb[0].mxu0
    %v332 = vadd.f32 %v81, %v331
    %v333 = vpop.f32.mrb[0].mxu0
    %v334 = vadd.f32 %v81, %v333
    %335 = vmatprep.mubr.f32.mxu0 0.0
    %336 = vmatmul.mubr.f32.gmra.mrb[0].mxu0 %v99
    %v337 = vpop.f32.mrb[0].mxu0
    %v338 = vadd.f32 %v86, %v337
    %v339 = vpop.f32.mrb[0].mxu0
    %v340 = vadd.f32 %v86, %v339
    %341 = vdwg.mxu0
    %v342 = vmax.f32 %v320, 0.0
    %v343 = vmax.f32 %v322, 0.0
    %v344 = vmax.f32 %v326, 0.0
    %v345 = vmax.f32 %v328, 0.0
    %v346 = vmax.f32 %v332, 0.0
    %v347 = vmax.f32 %v334, 0.0
    %v348 = vmax.f32 %v338, 0.0
    %v349 = vmax.f32 %v340, 0.0
    %v350 = vadd.f32 %v342, %v343
    %351 = vadd.xlane.f32.xlu0 %v350
    %v352 = vpop.xlane.xlu0 %351
    %v353 = vadd.f32 %v344, %v345
    %354 = vadd.xlane.f32.xlu0 %v353
    %v355 = vpop.xlane.xlu0 %354
    %v356 = vadd.f32 %v346, %v347
    %357 = vadd.xlane.f32.xlu0 %v356
    %v358 = vpop.xlane.xlu0 %357
    %v359 = vadd.f32 %v348, %v349
    %360 = vadd.xlane.f32.xlu0 %v359
    %v361 = vpop.xlane.xlu0 %360
    %v362 = vmul.f32 %v352, 0.00390625
    %v363 = vmul.f32 %v355, 0.00390625
    %v364 = vmul.f32 %v358, 0.00390625
    %v365 = vmul.f32 %v361, 0.00390625
    %v366 = vmax.f32 %v342, %v343
    %367 = vmax.xlane.f32.xlu0 %v366
    %v368 = vpop.xlane.xlu0 %367
    %v369 = vmax.f32 %v344, %v345
    %370 = vmax.xlane.f32.xlu0 %v369
    %v371 = vpop.xlane.xlu0 %370
    %v372 = vmax.f32 %v346, %v347
    %373 = vmax.xlane.f32.xlu0 %v372
    %v374 = vpop.xlane.xlu0 %373
    %v375 = vmax.f32 %v348, %v349
    %376 = vmax.xlane.f32.xlu0 %v375
    %v377 = vpop.xlane.xlu0 %376
    %v378 = vadd.f32 %v362, %v368
    %v379 = vadd.f32 %v363, %v371
    %v380 = vadd.f32 %v364, %v374
    %v381 = vadd.f32 %v365, %v377
    %vm382 = vcmp.eq.s32.totalorder %v59, 1
    %v383 = vld [vmem:[#allocation2] sm:$0xff]
    %v384 = vld [vmem:[#allocation2 + $0x8] sm:$0xff]
    %v385 = vld [vmem:[#allocation2 + $0x10] sm:$0xff]
    %v386 = vld [vmem:[#allocation2 + $0x18] sm:$0xff]
    %v387 = vsel %vm382, %v378, %v383
    %v388 = vsel %vm382, %v379, %v384
    %v389 = vsel %vm382, %v380, %v385
    %v390 = vsel %vm382, %v381, %v386
    %391 = vst.msk [vmem:[#allocation2] sm:$0xff] %vm239, %v387
    %392 = vst.msk [vmem:[#allocation2 + $0x8] sm:$0xff] %vm239, %v388
    %393 = vst.msk [vmem:[#allocation2 + $0x10] sm:$0xff] %vm239, %v389
    %394 = vst.msk [vmem:[#allocation2 + $0x18] sm:$0xff] %vm239, %v390
    %v395 = vld [vmem:[#allocation2] sm:$0xff]
    %v396 = vld [vmem:[#allocation2 + $0x8] sm:$0xff]
    %v397 = vld [vmem:[#allocation2 + $0x10] sm:$0xff]
    %v398 = vld [vmem:[#allocation2 + $0x18] sm:$0xff]
    %v400 = vsel %vm88, %v54, 0
    %v403 = vsel %vm88, %v55, 0
    %v406 = vsel %vm88, %v56, 0
    %v409 = vsel %vm88, %v57, 0
    %411 = vmatprep.subr.mxu0 0.0
    %412 = vmatpush1.msra.mxu0 %v395
    %413 = vmatprep.subr.mxu0 0.0
    %414 = vmatpush1.msra.mxu0 %v396
    %415 = vmatprep.subr.mxu0 0.0
    %416 = vmatpush1.msra.mxu0 %v397
    %417 = vmatprep.subr.mxu0 0.0
    %418 = vmatpush1.msra.mxu0 %v398
    %419 = vmatprep.subr.mxu0 0.0
    %420 = vmatpush1.msra.mxu0 0.0
    %421 = vmatprep.subr.mxu0 0.0
    %422 = vmatpush1.msra.mxu0 0.0
    %423 = vmatprep.subr.mxu0 0.0
    %424 = vmatpush1.msra.mxu0 0.0
    %425 = vmatprep.subr.mxu0 0.0
    %426 = vmatpush1.msra.mxu0 0.0
    %427 = vmatprep.subr.mxu0 0.0
    %428 = vmatpush1.msra.mxu0 0.0
    %429 = vmatprep.subr.mxu0 0.0
    %430 = vmatpush1.msra.mxu0 0.0
    %431 = vmatprep.subr.mxu0 0.0
    %432 = vmatpush1.msra.mxu0 0.0
    %433 = vmatprep.subr.mxu0 0.0
    %434 = vmatpush1.msra.mxu0 0.0
    %435 = vmatprep.subr.mxu0 0.0
    %436 = vmatpush1.msra.mxu0 0.0
    %437 = vmatprep.subr.mxu0 0.0
    %438 = vmatpush1.msra.mxu0 0.0
    %439 = vmatprep.subr.mxu0 0.0
    %440 = vmatpush1.msra.mxu0 0.0
    %441 = vmatprep.subr.mxu0 0.0
    %442 = vmatpush1.msra.mxu0 0.0
    %443 = vmatprep.subr.mxu0 0.0
    %444 = vmatpush1.msra.mxu0 0.0
    %445 = vmatprep.subr.mxu0 0.0
    %446 = vmatpush1.msra.mxu0 0.0
    %447 = vmatprep.subr.mxu0 0.0
    %448 = vmatpush1.msra.mxu0 0.0
    %449 = vmatprep.subr.mxu0 0.0
    %450 = vmatpush1.msra.mxu0 0.0
    %451 = vmatprep.subr.mxu0 0.0
    %452 = vmatpush1.msra.mxu0 0.0
    %453 = vmatprep.subr.mxu0 0.0
    %454 = vmatpush1.msra.mxu0 0.0
    %455 = vmatprep.subr.mxu0 0.0
    %456 = vmatpush1.msra.mxu0 0.0
    %457 = vmatprep.subr.mxu0 0.0
    %458 = vmatpush1.msra.mxu0 0.0
    %459 = vmatprep.subr.mxu0 0.0
    %460 = vmatpush1.msra.mxu0 0.0
    %461 = vmatprep.subr.mxu0 0.0
    %462 = vmatpush1.msra.mxu0 0.0
    %463 = vmatprep.subr.mxu0 0.0
    %464 = vmatpush1.msra.mxu0 0.0
    %465 = vmatprep.subr.mxu0 0.0
    %466 = vmatpush1.msra.mxu0 0.0
    %467 = vmatprep.subr.mxu0 0.0
    %468 = vmatpush1.msra.mxu0 0.0
    %469 = vmatprep.subr.mxu0 0.0
    %470 = vmatpush1.msra.mxu0 0.0
    %471 = vmatprep.subr.mxu0 0.0
    %472 = vmatpush1.msra.mxu0 0.0
    %473 = vmatprep.subr.mxu0 0.0
    %474 = vmatpush1.msra.mxu0 0.0
    %475 = vmatprep.mubr.f32.mxu0 0.0
    %476 = vmatmul.mubr.f32.gmra.mrb[0].mxu0 %v400
    %v477 = vpop.f32.mrb[0].mxu0
    %v478 = vadd.f32 0.0, %v477
    %v479 = vpop.f32.mrb[0].mxu0
    %480 = vmatprep.mubr.f32.mxu0 0.0
    %481 = vmatmul.mubr.f32.gmra.mrb[0].mxu0 %v403
    %v482 = vpop.f32.mrb[0].mxu0
    %v483 = vadd.f32 0.0, %v482
    %v484 = vpop.f32.mrb[0].mxu0
    %485 = vmatprep.mubr.f32.mxu0 0.0
    %486 = vmatmul.mubr.f32.gmra.mrb[0].mxu0 %v406
    %v487 = vpop.f32.mrb[0].mxu0
    %v488 = vadd.f32 0.0, %v487
    %v489 = vpop.f32.mrb[0].mxu0
    %490 = vmatprep.mubr.f32.mxu0 0.0
    %491 = vmatmul.mubr.f32.gmra.mrb[0].mxu0 %v409
    %v492 = vpop.f32.mrb[0].mxu0
    %v493 = vadd.f32 0.0, %v492
    %v494 = vpop.f32.mrb[0].mxu0
    %495 = vdwg.mxu0
    %v496 = vxor.u32 %v478, 2147483648
    %v497 = vxor.u32 %v483, 2147483648
    %v498 = vxor.u32 %v488, 2147483648
    %v499 = vxor.u32 %v493, 2147483648
    %v500 = vmul.f32 %v496, 1.442695
    %v501 = vpow.pop %v500
    %v502 = vmul.f32 %v497, 1.442695
    %v503 = vpow.pop %v502
    %v504 = vmul.f32 %v498, 1.442695
    %v505 = vpow.pop %v504
    %v506 = vmul.f32 %v499, 1.442695
    %v507 = vpow.pop %v506
    %v508 = vadd.f32 %v501, 1.0
    %v509 = vadd.f32 %v503, 1.0
    %v510 = vadd.f32 %v505, 1.0
    %v511 = vadd.f32 %v507, 1.0
    %v512 = vrcp.pop %v508
    %v513 = vmul.f32 1.0, %v512
    %v514 = vrcp.pop %v509
    %v515 = vmul.f32 1.0, %v514
    %v516 = vrcp.pop %v510
    %v517 = vmul.f32 1.0, %v516
    %v518 = vrcp.pop %v511
    %v519 = vmul.f32 1.0, %v518
    %520 = vst.msk [vmem:[#allocation2] sm:$0xff] %vm239, %v513
    %521 = vst.msk [vmem:[#allocation2 + $0x8] sm:$0xff] %vm239, %v515
    %522 = vst.msk [vmem:[#allocation2 + $0x10] sm:$0xff] %vm239, %v517
    %523 = vst.msk [vmem:[#allocation2 + $0x18] sm:$0xff] %vm239, %v519
    %v524 = vld [vmem:[#allocation2] sm:$0xff]
    %v525 = vld [vmem:[#allocation2 + $0x8] sm:$0xff]
    %v526 = vld [vmem:[#allocation2 + $0x10] sm:$0xff]
    %v527 = vld [vmem:[#allocation2 + $0x18] sm:$0xff]
    %v528 = vsel %vm230, %v524, 0.0
    %v529 = vsel %vm230, %v525, 0.0
    %v530 = vsel %vm230, %v526, 0.0
    %v531 = vsel %vm230, %v527, 0.0
    %v532 = vsel %vm239, %v528, 0.0
    %533 = vadd.xlane.f32.xlu0 %v532
    %v534 = vpop.xlane.xlu0 %533
    %v535 = vsel %vm239, %v529, 0.0
    %536 = vadd.xlane.f32.xlu0 %v535
    %v537 = vpop.xlane.xlu0 %536
    %v538 = vsel %vm239, %v530, 0.0
    %539 = vadd.xlane.f32.xlu0 %v538
    %v540 = vpop.xlane.xlu0 %539
    %v541 = vsel %vm239, %v531, 0.0
    %542 = vadd.xlane.f32.xlu0 %v541
    %v543 = vpop.xlane.xlu0 %542
    %v544 = vld [vmem:[#allocation3] sm:$0xff]
    %v545 = vld [vmem:[#allocation3 + $0x8] sm:$0xff]
    %v546 = vld [vmem:[#allocation3 + $0x10] sm:$0xff]
    %v547 = vld [vmem:[#allocation3 + $0x18] sm:$0xff]
    %v548 = vld [vmem:[#allocation3 + $0x20] sm:$0xff]
    %v549 = vld [vmem:[#allocation3 + $0x28] sm:$0xff]
    %v550 = vld [vmem:[#allocation3 + $0x30] sm:$0xff]
    %v551 = vld [vmem:[#allocation3 + $0x38] sm:$0xff]
    %v552 = vmul.f32 %v544, %v534
    %v553 = vmul.f32 %v545, %v534
    %v554 = vmul.f32 %v546, %v537
    %v555 = vmul.f32 %v547, %v537
    %v556 = vmul.f32 %v548, %v540
    %v557 = vmul.f32 %v549, %v540
    %v558 = vmul.f32 %v550, %v543
    %v559 = vmul.f32 %v551, %v543
    %560 = vst [vmem:[#allocation8] sm:$0xff] %v552
    %561 = vst [vmem:[#allocation8 + $0x8] sm:$0xff] %v553
    %562 = vst [vmem:[#allocation8 + $0x10] sm:$0xff] %v554
    %563 = vst [vmem:[#allocation8 + $0x18] sm:$0xff] %v555
    %564 = vst [vmem:[#allocation8 + $0x20] sm:$0xff] %v556
    %565 = vst [vmem:[#allocation8 + $0x28] sm:$0xff] %v557
    %566 = vst [vmem:[#allocation8 + $0x30] sm:$0xff] %v558
    %567 = vst [vmem:[#allocation8 + $0x38] sm:$0xff] %v559
    %v568 = vld [vmem:[#allocation2] sm:$0xff]
    %v569 = vld [vmem:[#allocation2 + $0x8] sm:$0xff]
    %v570 = vld [vmem:[#allocation2 + $0x10] sm:$0xff]
    %v571 = vld [vmem:[#allocation2 + $0x18] sm:$0xff]
    %v572 = vsel %vm382, %v568, 0.0
    %v573 = vsel %vm382, %v569, 0.0
    %v574 = vsel %vm382, %v570, 0.0
    %v575 = vsel %vm382, %v571, 0.0
    %v576 = vsel %vm239, %v572, 0.0
    %577 = vadd.xlane.f32.xlu0 %v576
    %v578 = vpop.xlane.xlu0 %577
    %v579 = vsel %vm239, %v573, 0.0
    %580 = vadd.xlane.f32.xlu0 %v579
    %v581 = vpop.xlane.xlu0 %580
    %v582 = vsel %vm239, %v574, 0.0
    %583 = vadd.xlane.f32.xlu0 %v582
    %v584 = vpop.xlane.xlu0 %583
    %v585 = vsel %vm239, %v575, 0.0
    %586 = vadd.xlane.f32.xlu0 %v585
    %v587 = vpop.xlane.xlu0 %586
    %v588 = vld [vmem:[%s244] sm:$0xff]
    %v589 = vld [vmem:[%s244 + $0x8] sm:$0xff]
    %v590 = vld [vmem:[%s244 + $0x10] sm:$0xff]
    %v591 = vld [vmem:[%s244 + $0x18] sm:$0xff]
    %v592 = vld [vmem:[%s244 + $0x20] sm:$0xff]
    %v593 = vld [vmem:[%s244 + $0x28] sm:$0xff]
    %v594 = vld [vmem:[%s244 + $0x30] sm:$0xff]
    %v595 = vld [vmem:[%s244 + $0x38] sm:$0xff]
    %v596 = vmul.f32 %v588, %v578
    %v597 = vmul.f32 %v589, %v578
    %v598 = vmul.f32 %v590, %v581
    %v599 = vmul.f32 %v591, %v581
    %v600 = vmul.f32 %v592, %v584
    %v601 = vmul.f32 %v593, %v584
    %v602 = vmul.f32 %v594, %v587
    %v603 = vmul.f32 %v595, %v587
    %s604 = scalar_lea.vmem [#allocation8], 64
    %605 = vst [vmem:[%s604] sm:$0xff] %v596
    %606 = vst [vmem:[%s604 + $0x8] sm:$0xff] %v597
    %607 = vst [vmem:[%s604 + $0x10] sm:$0xff] %v598
    %608 = vst [vmem:[%s604 + $0x18] sm:$0xff] %v599
    %609 = vst [vmem:[%s604 + $0x20] sm:$0xff] %v600
    %610 = vst [vmem:[%s604 + $0x28] sm:$0xff] %v601
    %611 = vst [vmem:[%s604 + $0x30] sm:$0xff] %v602
    %612 = vst [vmem:[%s604 + $0x38] sm:$0xff] %v603
    // Predicated region
    $region26: #{tpu_custom_call.1} parent=1 // pred_check
      _
    $region27: #{tpu_custom_call.1} parent=1 // pred_check_branch
      %614 = sbr.rel (0) target = $region29
    $region28: #{tpu_custom_call.1} parent=1 // pred_region
      %s616 = ssub.s32 2048, 2048
      %617 = vsyncadd [#allocation5], %s616
      %s618 = sshll.u32 [#allocation8], 4
      %s619 = int_to_ptr.vmem [resolvable:$true] %s618
      %624 = dma.vmem_to_hbm [thread:$0]  %s619, 2048, %s4, [#allocation5], 256, 256, 16
    $region29: #{tpu_custom_call.1} parent=1 // pred_fallthru
      _
    // Predicated region
    $region30: #{tpu_custom_call.1} parent=1 // pred_check
      _
    $region31: #{tpu_custom_call.1} parent=1 // pred_check_branch
      %626 = sbr.rel (0) target = $region33
    $region32: #{tpu_custom_call.1} parent=1 // pred_region
      %627 = dma.done [#allocation5], 2048
    $region33: #{tpu_custom_call.1} parent=1 // pred_fallthru
      _
    %628 = vsyncpa [#allocation4], 1
    %629 = vsyncpa [#allocation7], 1
    %630 = vsyncpa [#allocation5], 1

</llo_original>
